<compile_context>
chip_gen: v6e
topology: v6e:2x2x1
jax: 0.10.0
libtpu: 0.0.40
codegen_flags: <defaults>
</compile_context>

<pallas_src>
import jax
import jax.numpy as jnp
from jax.experimental import pallas as pl
from jax.experimental.pallas import tpu as pltpu

LANES = 128
SUBLANES = 8
MAX_TILE_ROWS = 2048  # 2048 x 128 f32 = 1 MiB per buffer.


def _round_up(a, b):
    return ((a + b - 1) // b) * b


def _bce_elementwise(x, t):
    # PyTorch's F.binary_cross_entropy clamps log outputs to >= -100.
    log_x = jnp.maximum(jnp.log(x), -100.0)
    log_1mx = jnp.maximum(jnp.log(1.0 - x), -100.0)
    return -(t * log_x + (1.0 - t) * log_1mx)


def _choose_tile_rows(rows):
    """Pick a tile height (multiple of 8) for a (rows, 128) slab."""
    rows_dn = max(SUBLANES, (rows // SUBLANES) * SUBLANES)
    tile = min(MAX_TILE_ROWS, rows_dn)
    # v7x megacore: make sure the "parallel" grid axis has >= 2 steps whenever
    # there is enough work to split (no effect on v5e/v6e, single TC).
    if pl.cdiv(rows, tile) < 2:
        half = (rows // (2 * SUBLANES)) * SUBLANES
        if half >= 512:
            tile = half
    return tile


def _prepare_2d(x_flat, t_flat):
    """Present flat f32 arrays as a lane-dense (rows, 128) slab.

    Zero-copy reshape whenever numel is 128-aligned with >= 8 full rows;
    otherwise pad only the lane tail (tiny copy, unavoidable). Padded / OOB
    elements are masked in-kernel by flat index < n, so no reliance on the
    pad-value trick.
    """
    n = x_flat.size
    rows_exact = pl.cdiv(n, LANES)
    if n % LANES == 0 and rows_exact >= SUBLANES:
        rows = rows_exact
        x2d = x_flat.reshape(rows, LANES)
        t2d = t_flat.reshape(rows, LANES)
    else:
        rows = _round_up(max(rows_exact, 1), SUBLANES)
        pad = rows * LANES - n
        x2d = jnp.pad(x_flat, (0, pad), constant_values=1.0).reshape(rows, LANES)
        t2d = jnp.pad(t_flat, (0, pad), constant_values=1.0).reshape(rows, LANES)

    tile_rows = _choose_tile_rows(rows)
    num_tiles = pl.cdiv(rows, tile_rows)
    # Mask needed if there are padded elements or a partial last grid tile.
    needs_mask = (rows * LANES != n) or (rows % tile_rows != 0)
    return x2d, t2d, tile_rows, num_tiles, needs_mask


def _compiler_params():
    return pltpu.CompilerParams(
        dimension_semantics=("parallel",),
        vmem_limit_bytes=32 * 1024 * 1024,
    )


def _make_sum_kernel(n_valid, tile_rows, needs_mask):
    """Sum-only BCE kernel: per-tile (8,128) vreg-shaped partial sums.

    8-row-chunk fori_loop keeps the accumulator in vregs and avoids
    materializing a tile_rows x 128 temporary. Cross-lane reduction of the
    partials is finished (cheaply) in the wrapper.
    """
    num_chunks = tile_rows // SUBLANES  # tile_rows is always a multiple of 8

    def kernel(x_ref, t_ref, part_ref):
        tile_base = pl.program_id(0) * (tile_rows * LANES)
        if needs_mask:
            row_iota = jax.lax.broadcasted_iota(jnp.int32, (SUBLANES, LANES), 0)
            lane_iota = jax.lax.broadcasted_iota(jnp.int32, (SUBLANES, LANES), 1)

        def chunk(c, acc):
            row0 = pl.multiple_of(c * SUBLANES, SUBLANES)
            x = x_ref[pl.ds(row0, SUBLANES), :].astype(jnp.float32)
            t = t_ref[pl.ds(row0, SUBLANES), :].astype(jnp.float32)
            loss = _bce_elementwise(x, t)
            if needs_mask:
                idx = tile_base + (row0 + row_iota) * LANES + lane_iota
                loss = jnp.where(idx < n_valid, loss, 0.0)
            return acc + loss

        acc = jax.lax.fori_loop(
            0, num_chunks, chunk,
            jnp.zeros((SUBLANES, LANES), jnp.float32),
            unroll=min(4, num_chunks),
        )
        part_ref[...] = acc[None]

    return kernel


def _bce_map_kernel(x_ref, t_ref, loss_ref):
    """Per-element BCE map (bootstrapped branch)."""
    x = x_ref[...].astype(jnp.float32)
    t = t_ref[...].astype(jnp.float32)
    loss_ref[...] = _bce_elementwise(x, t)


def _bce_sum(x2d, t2d, tile_rows, num_tiles, n_valid, needs_mask):
    """Sum-only Pallas pass (warm-up branch). Returns the total BCE sum."""
    rows, _ = x2d.shape
    n_arr = rows * LANES
    partials = pl.pallas_call(
        _make_sum_kernel(n_valid, tile_rows, needs_mask),
        out_shape=jax.ShapeDtypeStruct((num_tiles, SUBLANES, LANES), jnp.float32),
        grid_spec=pltpu.PrefetchScalarGridSpec(
            num_scalar_prefetch=0,
            grid=(num_tiles,),
            in_specs=[
                pl.BlockSpec((tile_rows, LANES), lambda i: (i, 0)),
                pl.BlockSpec((tile_rows, LANES), lambda i: (i, 0)),
            ],
            out_specs=pl.BlockSpec((1, SUBLANES, LANES), lambda i: (i, 0, 0)),
        ),
        compiler_params=_compiler_params(),
        cost_estimate=pl.CostEstimate(
            flops=5 * n_arr,
            transcendentals=2 * n_arr,
            bytes_accessed=8 * n_arr + num_tiles * SUBLANES * LANES * 4,
        ),
    )(x2d, t2d)
    return jnp.sum(partials)


def _bce_map(x2d, t2d, tile_rows, num_tiles):
    """Loss-map Pallas pass (bootstrapped branch)."""
    rows, _ = x2d.shape
    n_arr = rows * LANES
    return pl.pallas_call(
        _bce_map_kernel,
        out_shape=jax.ShapeDtypeStruct((rows, LANES), jnp.float32),
        grid_spec=pltpu.PrefetchScalarGridSpec(
            num_scalar_prefetch=0,
            grid=(num_tiles,),
            in_specs=[
                pl.BlockSpec((tile_rows, LANES), lambda i: (i, 0)),
                pl.BlockSpec((tile_rows, LANES), lambda i: (i, 0)),
            ],
            out_specs=pl.BlockSpec((tile_rows, LANES), lambda i: (i, 0)),
        ),
        compiler_params=_compiler_params(),
        cost_estimate=pl.CostEstimate(
            flops=5 * n_arr,
            transcendentals=2 * n_arr,
            bytes_accessed=12 * n_arr,
        ),
    )(x2d, t2d)


class BootstrappedBCE:
    """JAX/Pallas port of SegSwap's BootstrappedBCE (forward only).

    NOTE: `it` must be a static Python number (it selects a Python branch and
    the static top-k size), matching how the PyTorch module is used.
    """

    def __init__(self, start_warm=20000, end_warm=70000, top_p=0.15):
        self.start_warm = start_warm
        self.end_warm = end_warm
        self.top_p = top_p

    def __call__(self, input, target, it):
        # TODO(synk): optional bf16 input streaming (halves HBM read traffic,
        # biggest win on v5e) is intentionally not enabled to keep exact f32
        # parity with F.binary_cross_entropy.
        x = jnp.asarray(input, jnp.float32).reshape(-1)
        t = jnp.asarray(target, jnp.float32).reshape(-1)
        num_pixels = x.size

        x2d, t2d, tile_rows, num_tiles, needs_mask = _prepare_2d(x, t)

        if it < self.start_warm:
            # Warm-up: plain mean BCE; sum-only kernel (no loss-map writeback).
            total = _bce_sum(x2d, t2d, tile_rows, num_tiles, num_pixels, needs_mask)
            return total / num_pixels, 1.0

        # Bootstrapped branch: per-element loss map, then exact top-k mean.
        loss_map = _bce_map(x2d, t2d, tile_rows, num_tiles)
        raw_loss = loss_map.reshape(-1)[:num_pixels]

        if it > self.end_warm:
            this_p = self.top_p
        else:
            this_p = self.top_p + (1 - self.top_p) * (
                (self.end_warm - it) / (self.end_warm - self.start_warm)
            )

        k = max(int(num_pixels * this_p), 1)
        # TODO(synk): no in-kernel Pallas TPU top-k; exact selection via lax.top_k.
        topk_vals, _ = jax.lax.top_k(raw_loss, k)
        return jnp.mean(topk_vals), this_p


def _ref_bce_mean(x, t):
    return jnp.mean(_bce_elementwise(jnp.asarray(x, jnp.float32),
                                     jnp.asarray(t, jnp.float32)))


if __name__ == "__main__":
    key = jax.random.PRNGKey(0)
    k1, k2, k3, k4 = jax.random.split(key, 4)

    crit = BootstrappedBCE(start_warm=20000, end_warm=70000, top_p=0.15)

    # --- aligned case: NCHW (2, 4, 16, 16) = 2048 elements (zero-copy path) ---
    B, C, H, W = 2, 4, 16, 16
    logits = jax.random.normal(k1, (B, C, H, W), dtype=jnp.float32)
    input_probs = jax.nn.sigmoid(logits)
    target = jax.random.bernoulli(k2, p=0.5, shape=(B, C, H, W)).astype(jnp.float32)

    loss_warm, p_warm = crit(input_probs, target, it=100)        # warm-up branch
    loss_warm = jax.block_until_ready(loss_warm)
    loss_boot, p_boot = crit(input_probs, target, it=50000)      # bootstrapped branch
    loss_boot = jax.block_until_ready(loss_boot)

    ref_warm = _ref_bce_mean(input_probs, target)
    assert abs(float(loss_warm) - float(ref_warm)) < 1e-4
    assert float(loss_boot) >= float(loss_warm)                  # hard examples >= mean
    assert p_warm == 1.0 and 0.15 <= p_boot <= 1.0

    # --- non-aligned case (exercises lane-tail padding + in-kernel masking): 130 elems ---
    shp = (1, 1, 10, 13)
    probs2 = jax.nn.sigmoid(jax.random.normal(k3, shp, dtype=jnp.float32))
    targ2 = jax.random.bernoulli(k4, p=0.5, shape=shp).astype(jnp.float32)

    lw2, _ = crit(probs2, targ2, it=100)
    lw2 = jax.block_until_ready(lw2)
    lb2, _ = crit(probs2, targ2, it=80000)
    lb2 = jax.block_until_ready(lb2)

    assert abs(float(lw2) - float(_ref_bce_mean(probs2, targ2))) < 1e-4
    assert float(lb2) >= float(lw2)

    print("KERNEL_OK")
</pallas_src>

<mosaic_0001>
module attributes {stable_mosaic.version = 11 : i64} {
  func.func @kernel(%arg0: i32, %arg1: memref<16x128xf32, #tpu.memory_space<vmem>>, %arg2: memref<16x128xf32, #tpu.memory_space<vmem>>, %arg3: memref<1x8x128xf32, #tpu.memory_space<vmem>>) attributes {dimension_semantics = [#tpu.dimension_semantics<parallel>], iteration_bounds = array<i64: 1>, scalar_prefetch = 0 : i64, scratch_operands = 0 : i64, tpu.core_type = #tpu.core_type<tc>, window_params = [{transform_indices = @transform_0, window_bounds = array<i64: 16, 128>}, {transform_indices = @transform_1, window_bounds = array<i64: 16, 128>}, {transform_indices = @transform_2, window_bounds = array<i64: 1, 8, 128>}]} {
    %cst = arith.constant 0.000000e+00 : f32
    %0 = vector.broadcast %cst : f32 to vector<8x128xf32>
    %c0_i32 = arith.constant 0 : i32
    %c8_i32 = arith.constant 8 : i32
    %1 = arith.muli %c0_i32, %c8_i32 : i32
    %2 = tpu.assume_multiple %1, 8 : i32
    %3 = arith.index_cast %2 : i32 to index
    %c0 = arith.constant 0 : index
    %4 = vector.load %arg1[%3, %c0] : memref<16x128xf32, #tpu.memory_space<vmem>>, vector<8x128xf32>
    %5 = arith.index_cast %2 : i32 to index
    %c0_0 = arith.constant 0 : index
    %6 = vector.load %arg2[%5, %c0_0] : memref<16x128xf32, #tpu.memory_space<vmem>>, vector<8x128xf32>
    %7 = math.log %4 : vector<8x128xf32>
    %cst_1 = arith.constant -1.000000e+02 : f32
    %8 = vector.broadcast %cst_1 : f32 to vector<8x128xf32>
    %9 = arith.maximumf %7, %8 : vector<8x128xf32>
    %cst_2 = arith.constant 1.000000e+00 : f32
    %10 = vector.broadcast %cst_2 : f32 to vector<8x128xf32>
    %11 = arith.subf %10, %4 : vector<8x128xf32>
    %12 = math.log %11 : vector<8x128xf32>
    %cst_3 = arith.constant -1.000000e+02 : f32
    %13 = vector.broadcast %cst_3 : f32 to vector<8x128xf32>
    %14 = arith.maximumf %12, %13 : vector<8x128xf32>
    %15 = arith.mulf %6, %9 : vector<8x128xf32>
    %cst_4 = arith.constant 1.000000e+00 : f32
    %16 = vector.broadcast %cst_4 : f32 to vector<8x128xf32>
    %17 = arith.subf %16, %6 : vector<8x128xf32>
    %18 = arith.mulf %17, %14 : vector<8x128xf32>
    %19 = arith.addf %15, %18 : vector<8x128xf32>
    %cst_5 = arith.constant 0.000000e+00 : f32
    %20 = vector.broadcast %cst_5 : f32 to vector<8x128xf32>
    %21 = arith.subf %20, %19 : vector<8x128xf32>
    %22 = arith.addf %0, %21 : vector<8x128xf32>
    %c1_i32 = arith.constant 1 : i32
    %c8_i32_6 = arith.constant 8 : i32
    %23 = arith.muli %c1_i32, %c8_i32_6 : i32
    %24 = tpu.assume_multiple %23, 8 : i32
    %25 = arith.index_cast %24 : i32 to index
    %c0_7 = arith.constant 0 : index
    %26 = vector.load %arg1[%25, %c0_7] : memref<16x128xf32, #tpu.memory_space<vmem>>, vector<8x128xf32>
    %27 = arith.index_cast %24 : i32 to index
    %c0_8 = arith.constant 0 : index
    %28 = vector.load %arg2[%27, %c0_8] : memref<16x128xf32, #tpu.memory_space<vmem>>, vector<8x128xf32>
    %29 = math.log %26 : vector<8x128xf32>
    %cst_9 = arith.constant -1.000000e+02 : f32
    %30 = vector.broadcast %cst_9 : f32 to vector<8x128xf32>
    %31 = arith.maximumf %29, %30 : vector<8x128xf32>
    %cst_10 = arith.constant 1.000000e+00 : f32
    %32 = vector.broadcast %cst_10 : f32 to vector<8x128xf32>
    %33 = arith.subf %32, %26 : vector<8x128xf32>
    %34 = math.log %33 : vector<8x128xf32>
    %cst_11 = arith.constant -1.000000e+02 : f32
    %35 = vector.broadcast %cst_11 : f32 to vector<8x128xf32>
    %36 = arith.maximumf %34, %35 : vector<8x128xf32>
    %37 = arith.mulf %28, %31 : vector<8x128xf32>
    %cst_12 = arith.constant 1.000000e+00 : f32
    %38 = vector.broadcast %cst_12 : f32 to vector<8x128xf32>
    %39 = arith.subf %38, %28 : vector<8x128xf32>
    %40 = arith.mulf %39, %36 : vector<8x128xf32>
    %41 = arith.addf %37, %40 : vector<8x128xf32>
    %cst_13 = arith.constant 0.000000e+00 : f32
    %42 = vector.broadcast %cst_13 : f32 to vector<8x128xf32>
    %43 = arith.subf %42, %41 : vector<8x128xf32>
    %44 = arith.addf %22, %43 : vector<8x128xf32>
    %c2_i32 = arith.constant 2 : i32
    %45 = vector.shape_cast %44 : vector<8x128xf32> to vector<1x8x128xf32>
    %c0_14 = arith.constant 0 : index
    %c0_15 = arith.constant 0 : index
    %c0_16 = arith.constant 0 : index
    %46 = vector.load %arg3[%c0_14, %c0_15, %c0_16] : memref<1x8x128xf32, #tpu.memory_space<vmem>>, vector<1x8x128xf32>
    tpu.vector_store %arg3[%c0_14, %c0_15, %c0_16], %45 {strides = array<i32>} : memref<1x8x128xf32, #tpu.memory_space<vmem>>, vector<1x8x128xf32>,
    return
  }
  func.func @transform_0(%arg0: i32) -> (i32, i32) {
    %c0_i32 = arith.constant 0 : i32
    %c0_i32_0 = arith.constant 0 : i32
    return %arg0, %c0_i32 : i32, i32
  }
  func.func @transform_1(%arg0: i32) -> (i32, i32) {
    %c0_i32 = arith.constant 0 : i32
    %c0_i32_0 = arith.constant 0 : i32
    return %arg0, %c0_i32 : i32, i32
  }
  func.func @transform_2(%arg0: i32) -> (i32, i32, i32) {
    %c0_i32 = arith.constant 0 : i32
    %c0_i32_0 = arith.constant 0 : i32
    %c0_i32_1 = arith.constant 0 : i32
    return %arg0, %c0_i32, %c0_i32_0 : i32, i32, i32
  }
}

</mosaic_0001>

<llo_original>
// kernel: tpu_custom_call.1
$region0: #{tpu_custom_call.1}
  #allocation0 [shape = 'u32[]', space=smem, size = 0x4, offset = 0x4, fixed_abs, tag = 'smem constant byte address 0x4 - core index']
  #allocation1 [shape = 'u32[144,128]{1,0:T(1,128)}', space=vmem, size = 0x12000, scoped, tag = 'internal scratch']
  %s0 = inlined_call_operand.hbm [shape: f32[16,128], index: 0, kind: input, shape index: {}]
  %s1 = inlined_call_operand.hbm [shape: f32[16,128], index: 1, kind: input, shape index: {}]
  %s2 = inlined_call_operand.hbm [shape: f32[1,8,128], index: 2, kind: output, shape index: {}]
  %s3 = sld [smem:[#allocation0]]
  $region26: #{tpu_custom_call.1} parent=0
    _
  %s5 = ssub.s32 1, %s3
  %s6 = scalar_select 0, %s5, %s3
  $region1: #{tpu_custom_call.1} parent=0
    #allocation2 [shape = 'u8[8192]{0}', space=vmem, size = 0x2000, scoped, tag = 'input window, operand 0, single buffered']
    #allocation3 [shape = 's32[1]{0}', space=sflag, size = 0x4, scoped, tag = 'scoped memory for tpu_custom_call.1']
    #allocation4 [shape = 's32[1]{0}', space=sflag, size = 0x4, scoped, tag = 'scoped memory for tpu_custom_call.1']
    #allocation5 [shape = 'u8[8192]{0}', space=vmem, size = 0x2000, scoped, tag = 'input window, operand 1, single buffered']
    #allocation6 [shape = 's32[1]{0}', space=sflag, size = 0x4, scoped, tag = 'scoped memory for tpu_custom_call.1']
    #allocation7 [shape = 'u8[4096]{0}', space=vmem, size = 0x1000, scoped, tag = 'output window, operand 0, single buffered']
    %7 = vsyncpa [#allocation3], 0
    %8 = vsyncpa [#allocation6], 0
    %9 = vsyncpa [#allocation4], 0
    // Predicated region
    $region2: #{tpu_custom_call.1} parent=1 // pred_check
      _
    $region3: #{tpu_custom_call.1} parent=1 // pred_check_branch
      %11 = sbr.rel (0) target = $region5
    $region4: #{tpu_custom_call.1} parent=1 // pred_region
      %s13 = ssub.s32 256, 256
      %14 = vsyncadd [#allocation3], %s13
      %s15 = sshll.u32 [#allocation2], 4
      %s16 = int_to_ptr.vmem [resolvable:$true] %s15
      %21 = dma.hbm_to_vmem [thread:$0]  %s0, 256, %s16, [#allocation3], 128, 128, 8
    $region5: #{tpu_custom_call.1} parent=1 // pred_fallthru
      _
    // Predicated region
    $region6: #{tpu_custom_call.1} parent=1 // pred_check
      _
    $region7: #{tpu_custom_call.1} parent=1 // pred_check_branch
      %23 = sbr.rel (0) target = $region9
    $region8: #{tpu_custom_call.1} parent=1 // pred_region
      %s25 = ssub.s32 256, 256
      %26 = vsyncadd [#allocation6], %s25
      %s27 = sshll.u32 [#allocation5], 4
      %s28 = int_to_ptr.vmem [resolvable:$true] %s27
      %33 = dma.hbm_to_vmem [thread:$0]  %s1, 256, %s28, [#allocation6], 128, 128, 8
    $region9: #{tpu_custom_call.1} parent=1 // pred_fallthru
      _
    // Predicated region
    $region10: #{tpu_custom_call.1} parent=1 // pred_check
      _
    $region11: #{tpu_custom_call.1} parent=1 // pred_check_branch
      %35 = sbr.rel (0) target = $region13
    $region12: #{tpu_custom_call.1} parent=1 // pred_region
      %36 = dma.done [#allocation3], 256
    $region13: #{tpu_custom_call.1} parent=1 // pred_fallthru
      _
    // Predicated region
    $region14: #{tpu_custom_call.1} parent=1 // pred_check
      _
    $region15: #{tpu_custom_call.1} parent=1 // pred_check_branch
      %38 = sbr.rel (0) target = $region17
    $region16: #{tpu_custom_call.1} parent=1 // pred_region
      %39 = dma.done [#allocation6], 256
    $region17: #{tpu_custom_call.1} parent=1 // pred_fallthru
      _
    %v40 = vld [vmem:[#allocation2] sm:$0xff]
    %v41 = vld [vmem:[#allocation5] sm:$0xff]
    %v42 = vlog2.pop %v40
    %v43 = vmul.f32 %v42, 0.6931472
    %v44 = vmax.f32 %v43, -100.0
    %v45 = vsub.f32 1.0, %v40
    %v46 = vlog2.pop %v45
    %v47 = vmul.f32 %v46, 0.6931472
    %v48 = vmax.f32 %v47, -100.0
    %v49 = vmul.f32 %v41, %v44
    %v50 = vsub.f32 1.0, %v41
    %v51 = vmul.f32 %v50, %v48
    %v52 = vadd.f32 %v49, %v51
    %v53 = vsub.f32 0.0, %v52
    %v54 = vadd.f32 %v53, 0.0
    %s55 = scalar_lea.vmem [#allocation2], 8
    %v56 = vld [vmem:[%s55] sm:$0xff]
    %s57 = scalar_lea.vmem [#allocation5], 8
    %v58 = vld [vmem:[%s57] sm:$0xff]
    %v59 = vlog2.pop %v56
    %v60 = vmul.f32 %v59, 0.6931472
    %v61 = vmax.f32 %v60, -100.0
    %v62 = vsub.f32 1.0, %v56
    %v63 = vlog2.pop %v62
    %v64 = vmul.f32 %v63, 0.6931472
    %v65 = vmax.f32 %v64, -100.0
    %v66 = vmul.f32 %v58, %v61
    %v67 = vsub.f32 1.0, %v58
    %v68 = vmul.f32 %v67, %v65
    %v69 = vadd.f32 %v66, %v68
    %v70 = vsub.f32 0.0, %v69
    %v71 = vadd.f32 %v54, %v70
    %72 = vst [vmem:[#allocation7] sm:$0xff] %v71
    // Predicated region
    $region18: #{tpu_custom_call.1} parent=1 // pred_check
      _
    $region19: #{tpu_custom_call.1} parent=1 // pred_check_branch
      %74 = sbr.rel (0) target = $region21
    $region20: #{tpu_custom_call.1} parent=1 // pred_region
      %s76 = ssub.s32 128, 128
      %77 = vsyncadd [#allocation4], %s76
      %s79 = sshll.u32 [#allocation7], 4
      %s80 = int_to_ptr.vmem [resolvable:$true] %s79
      %82 = dma.vmem_to_hbm [thread:$0]  %s80, 128, %s2, [#allocation4]
    $region21: #{tpu_custom_call.1} parent=1 // pred_fallthru
      _
    // Predicated region
    $region22: #{tpu_custom_call.1} parent=1 // pred_check
      _
    $region23: #{tpu_custom_call.1} parent=1 // pred_check_branch
      %84 = sbr.rel (0) target = $region25
    $region24: #{tpu_custom_call.1} parent=1 // pred_region
      %85 = dma.done [#allocation4], 128
    $region25: #{tpu_custom_call.1} parent=1 // pred_fallthru
      _
    %86 = vsyncpa [#allocation3], 1
    %87 = vsyncpa [#allocation6], 1
    %88 = vsyncpa [#allocation4], 1

</llo_original>
